<compile_context>
chip_gen: v7x
topology: tpu7x:2x2x1
jax: 0.10.0
libtpu: 0.0.40
codegen_flags: <defaults>
</compile_context>

<pallas_src>
import jax
import jax.numpy as jnp
from jax.experimental import pallas as pl
from jax.experimental.pallas import tpu as pltpu


def _make_linear_kernel(n_rows: int, in_features: int):
    """y[n, :] = sum_k x[n, k] * Wt[k, :] + (bias + shape_offset).

    Contraction fully unrolled on the VPU; x comes from SMEM so each x[n, k]
    is a scalar operand that splats for free (no lane slicing / broadcasting).
    """

    def kernel(x_ref, wb_ref, o_ref):
        # x_ref : SMEM (n_rows, in_features)  -- scalar reads
        # wb_ref: VMEM (1 + in_features, OUT) -- row 0 = bias_eff, rows 1.. = Wt
        # o_ref : VMEM (n_rows, OUT)
        rows = []
        for n in range(n_rows):
            acc = wb_ref[0:1, :]                      # bias with +1 offset folded in
            for k in range(in_features):
                acc = acc + x_ref[n, k] * wb_ref[k + 1:k + 2, :]
            rows.append(acc)
        out = rows[0] if n_rows == 1 else jnp.concatenate(rows, axis=0)
        if out.dtype != o_ref.dtype:                   # trace-time check only
            out = out.astype(o_ref.dtype)
        o_ref[...] = out

    return kernel


def prepare_params(weight, bias, last_dim: int):
    """One-time parameter prep (outside the per-call path).

    weight: (OUT, IN) torch layout -> stored pre-transposed (IN, OUT).
    bias  : (OUT,)    -> bias + (x.shape[-1] - 2) folded in.
    Returns a single packed (1 + IN, OUT) f32 array:
        row 0      = bias_eff
        rows 1..IN = W^T
    """
    shape_offset = jnp.float32(last_dim - 2)           # v3 = x1.shape[-1] - 2
    wt = jnp.asarray(weight, jnp.float32).T            # (IN, OUT)
    bias_eff = (jnp.asarray(bias, jnp.float32) + shape_offset).reshape(1, -1)
    wb = jnp.concatenate([bias_eff, wt], axis=0)       # (1 + IN, OUT)
    return wb


def model_forward(x, wb):
    """x: (N, IN) f32;  wb: (1+IN, OUT) f32 packed params from prepare_params."""
    n, in_f = x.shape
    assert wb.shape[0] == in_f + 1, (
        "x.shape[-1] does not match the in_features baked into the packed params")
    out_f = wb.shape[1]

    flops = 2 * n * in_f * out_f
    bytes_accessed = 4 * (n * in_f + wb.size + n * out_f)

    return pl.pallas_call(
        _make_linear_kernel(n, in_f),
        out_shape=jax.ShapeDtypeStruct((n, out_f), jnp.float32),
        in_specs=[
            pl.BlockSpec(memory_space=pltpu.MemorySpace.SMEM),   # x -> scalar reads
            pl.BlockSpec(memory_space=pltpu.MemorySpace.VMEM),   # packed W^T + bias
        ],
        out_specs=pl.BlockSpec(memory_space=pltpu.MemorySpace.VMEM),
        cost_estimate=pl.CostEstimate(
            flops=flops, transcendentals=0, bytes_accessed=bytes_accessed),
    )(x, wb)


if __name__ == "__main__":
    key = jax.random.PRNGKey(0)
    k_x, k_w, k_b = jax.random.split(key, 3)

    N, IN_F, OUT_F = 1, 3, 4   # matches torch.randn(1, 3), nn.Linear(3, 4)

    # Input like torch.randn(1, 3)
    x = jax.random.normal(k_x, (N, IN_F), dtype=jnp.float32)

    # Deterministic nn.Linear(3, 4)-style init: U(-1/sqrt(in), 1/sqrt(in))
    bound = 1.0 / jnp.sqrt(jnp.float32(IN_F))
    weight = jax.random.uniform(k_w, (OUT_F, IN_F), jnp.float32, -bound, bound)
    bias = jax.random.uniform(k_b, (OUT_F,), jnp.float32, -bound, bound)

    # One-time param prep (hoisted out of the per-call path).
    wb = prepare_params(weight, bias, last_dim=IN_F)

    out = model_forward(x, wb)
    out = jax.block_until_ready(out)

    # Reference check in plain JAX (same `shape[-1] - 2` interpretation).
    ref = x @ weight.T + bias + (x.shape[-1] - 2)
    assert out.shape == (N, OUT_F)
    assert jnp.allclose(out, ref, atol=1e-5, rtol=1e-5)

    print("KERNEL_OK")
</pallas_src>

<mosaic_0001>
module attributes {stable_mosaic.version = 11 : i64} {
  func.func @kernel(%arg0: memref<1x3xf32, #tpu.memory_space<smem>>, %arg1: memref<4x4xf32, #tpu.memory_space<vmem>>, %arg2: memref<1x4xf32, #tpu.memory_space<vmem>>) attributes {dimension_semantics = [], scalar_prefetch = 0 : i64, scratch_operands = 0 : i64, tpu.core_type = #tpu.core_type<tc>} {
    %c0 = arith.constant 0 : index
    %c0_0 = arith.constant 0 : index
    %0 = vector.load %arg1[%c0, %c0_0] : memref<4x4xf32, #tpu.memory_space<vmem>>, vector<1x4xf32>
    %c0_1 = arith.constant 0 : index
    %c0_2 = arith.constant 0 : index
    %1 = memref.load %arg0[%c0_1, %c0_2] : memref<1x3xf32, #tpu.memory_space<smem>>
    %c1 = arith.constant 1 : index
    %c0_3 = arith.constant 0 : index
    %2 = vector.load %arg1[%c1, %c0_3] : memref<4x4xf32, #tpu.memory_space<vmem>>, vector<1x4xf32>
    %3 = vector.broadcast %1 : f32 to vector<1x4xf32>
    %4 = arith.mulf %3, %2 : vector<1x4xf32>
    %5 = arith.addf %0, %4 : vector<1x4xf32>
    %c0_4 = arith.constant 0 : index
    %c1_5 = arith.constant 1 : index
    %6 = memref.load %arg0[%c0_4, %c1_5] : memref<1x3xf32, #tpu.memory_space<smem>>
    %c2 = arith.constant 2 : index
    %c0_6 = arith.constant 0 : index
    %7 = vector.load %arg1[%c2, %c0_6] : memref<4x4xf32, #tpu.memory_space<vmem>>, vector<1x4xf32>
    %8 = vector.broadcast %6 : f32 to vector<1x4xf32>
    %9 = arith.mulf %8, %7 : vector<1x4xf32>
    %10 = arith.addf %5, %9 : vector<1x4xf32>
    %c0_7 = arith.constant 0 : index
    %c2_8 = arith.constant 2 : index
    %11 = memref.load %arg0[%c0_7, %c2_8] : memref<1x3xf32, #tpu.memory_space<smem>>
    %c3 = arith.constant 3 : index
    %c0_9 = arith.constant 0 : index
    %12 = vector.load %arg1[%c3, %c0_9] : memref<4x4xf32, #tpu.memory_space<vmem>>, vector<1x4xf32>
    %13 = vector.broadcast %11 : f32 to vector<1x4xf32>
    %14 = arith.mulf %13, %12 : vector<1x4xf32>
    %15 = arith.addf %10, %14 : vector<1x4xf32>
    %c0_10 = arith.constant 0 : index
    %c0_11 = arith.constant 0 : index
    %16 = vector.load %arg2[%c0_10, %c0_11] : memref<1x4xf32, #tpu.memory_space<vmem>>, vector<1x4xf32>
    tpu.vector_store %arg2[%c0_10, %c0_11], %15 {strides = array<i32>} : memref<1x4xf32, #tpu.memory_space<vmem>>, vector<1x4xf32>,
    return
  }
}

</mosaic_0001>

<llo_original>
// kernel: tpu_custom_call.1
$region0: #{tpu_custom_call.1}
  #allocation0 [shape = 'u32[]', space=smem, size = 0x4, offset = 0x4, fixed_abs, tag = 'smem constant byte address 0x4 - core index']
  #allocation1 [shape = 'u32[144,128]{1,0:T(1,128)}', space=vmem, size = 0x12000, scoped, tag = 'internal scratch']
  %s0 = inlined_call_operand.hbm [shape: f32[1,3], index: 0, kind: input, shape index: {}]
  %s1 = inlined_call_operand.hbm [shape: f32[4,4], index: 1, kind: input, shape index: {}]
  %s2 = inlined_call_operand.hbm [shape: f32[1,4], index: 2, kind: output, shape index: {}]
  %s3 = sld [smem:[#allocation0]]
  $region26: #{tpu_custom_call.1} parent=0
    _
  %s5 = ssub.s32 1, %s3
  %s6 = scalar_select 0, %s5, %s3
  $region1: #{tpu_custom_call.1} parent=0
    #allocation2 [shape = 'u8[512]{0}', space=smem, size = 0x200, scoped, tag = 'input window, operand 0, single buffered']
    #allocation3 [shape = 's32[1]{0}', space=sflag, size = 0x4, scoped, tag = 'scoped memory for tpu_custom_call.1']
    #allocation4 [shape = 's32[1]{0}', space=sflag, size = 0x4, scoped, tag = 'scoped memory for tpu_custom_call.1']
    #allocation5 [shape = 's32[1]{0}', space=sflag, size = 0x4, scoped, tag = 'scoped memory for tpu_custom_call.1']
    #allocation6 [shape = 'u8[2048]{0}', space=vmem, size = 0x800, scoped, tag = 'input window, operand 1, single buffered']
    #allocation7 [shape = 'u8[512]{0}', space=vmem, size = 0x400, scoped, tag = 'output window, operand 0, single buffered']
    %7 = vsyncpa [#allocation5], 0
    %8 = vsyncpa [#allocation3], 0
    %9 = vsyncpa [#allocation4], 0
    // Predicated region
    $region2: #{tpu_custom_call.1} parent=1 // pred_check
      _
    $region3: #{tpu_custom_call.1} parent=1 // pred_check_branch
      %11 = sbr.rel (0) target = $region5
    $region4: #{tpu_custom_call.1} parent=1 // pred_region
      %s13 = ssub.s32 16, 16
      %14 = vsyncadd [#allocation5], %s13
      %17 = dma.hbm_to_smem %s0, 16, [#allocation2], [#allocation5]
    $region5: #{tpu_custom_call.1} parent=1 // pred_fallthru
      _
    // Predicated region
    $region6: #{tpu_custom_call.1} parent=1 // pred_check
      _
    $region7: #{tpu_custom_call.1} parent=1 // pred_check_branch
      %19 = sbr.rel (0) target = $region9
    $region8: #{tpu_custom_call.1} parent=1 // pred_region
      %s21 = ssub.s32 64, 64
      %22 = vsyncadd [#allocation3], %s21
      %s24 = sshll.u32 [#allocation6], 4
      %s25 = int_to_ptr.vmem [resolvable:$true] %s24
      %27 = dma.hbm_to_vmem [thread:$0]  %s1, 64, %s25, [#allocation3]
    $region9: #{tpu_custom_call.1} parent=1 // pred_fallthru
      _
    // Predicated region
    $region10: #{tpu_custom_call.1} parent=1 // pred_check
      _
    $region11: #{tpu_custom_call.1} parent=1 // pred_check_branch
      %29 = sbr.rel (0) target = $region13
    $region12: #{tpu_custom_call.1} parent=1 // pred_region
      %30 = dma.done [#allocation5], 16
    $region13: #{tpu_custom_call.1} parent=1 // pred_fallthru
      _
    // Predicated region
    $region14: #{tpu_custom_call.1} parent=1 // pred_check
      _
    $region15: #{tpu_custom_call.1} parent=1 // pred_check_branch
      %32 = sbr.rel (0) target = $region17
    $region16: #{tpu_custom_call.1} parent=1 // pred_region
      %33 = dma.done [#allocation3], 64
    $region17: #{tpu_custom_call.1} parent=1 // pred_fallthru
      _
    %34 = sfence
    %v35 = vld [vmem:[#allocation6] sm:$0x1]
    %s36 = sld [smem:[#allocation2]]
    %v37 = vld [vmem:[#allocation6 + $0x1] sm:$0x1]
    %v38 = vstv %s36
    %v39 = vmul.f32 %v38, %v37
    %v40 = vadd.f32 %v35, %v39
    %s41 = sld [smem:[#allocation2 + $0x1]]
    %v42 = vld [vmem:[#allocation6 + $0x2] sm:$0x1]
    %v43 = vstv %s41
    %v44 = vmul.f32 %v43, %v42
    %v45 = vadd.f32 %v40, %v44
    %s46 = sld [smem:[#allocation2 + $0x2]]
    %v47 = vld [vmem:[#allocation6 + $0x3] sm:$0x1]
    %v48 = vstv %s46
    %v49 = vmul.f32 %v48, %v47
    %v50 = vadd.f32 %v45, %v49
    %vm51 = vcmask 24576
    %52 = vst.msk [vmem:[#allocation7] sm:$0x1] %vm51, %v50
    // Predicated region
    $region18: #{tpu_custom_call.1} parent=1 // pred_check
      _
    $region19: #{tpu_custom_call.1} parent=1 // pred_check_branch
      %54 = sbr.rel (0) target = $region21
    $region20: #{tpu_custom_call.1} parent=1 // pred_region
      %s56 = ssub.s32 16, 16
      %57 = vsyncadd [#allocation4], %s56
      %s59 = sshll.u32 [#allocation7], 4
      %s60 = int_to_ptr.vmem [resolvable:$true] %s59
      %62 = dma.vmem_to_hbm [thread:$0]  %s60, 16, %s2, [#allocation4]
    $region21: #{tpu_custom_call.1} parent=1 // pred_fallthru
      _
    // Predicated region
    $region22: #{tpu_custom_call.1} parent=1 // pred_check
      _
    $region23: #{tpu_custom_call.1} parent=1 // pred_check_branch
      %64 = sbr.rel (0) target = $region25
    $region24: #{tpu_custom_call.1} parent=1 // pred_region
      %65 = dma.done [#allocation4], 16
    $region25: #{tpu_custom_call.1} parent=1 // pred_fallthru
      _
    %66 = vsyncpa [#allocation3], 1
    %67 = vsyncpa [#allocation4], 1
    %68 = vsyncpa [#allocation5], 1

</llo_original>
